<compile_context>
chip_gen: v7x
topology: tpu7x:2x2x1
jax: 0.10.0
libtpu: 0.0.40
codegen_flags: <defaults>
</compile_context>

<pallas_src>
import jax
import jax.numpy as jnp
from jax.experimental import pallas as pl
from jax.experimental.pallas import tpu as pltpu

LANES = 128
CH_ROWS = 512                    # rows per inner compute chunk (f32 working set ~256 KiB)
TARGET_BLOCK_BYTES = 4 << 20     # HBM bytes per operand per grid step (double-buffered)
NCORES = 2                       # leading "parallel" grid axis (v7x dual TC; neutral elsewhere)
VMEM_LIMIT_BYTES = 32 * 1024 * 1024


def _pick_tiles(rows, itemsize, tm_max=None):
    """Pick (tm, ch): rows per grid step and rows per inner compute chunk."""
    tm_target = TARGET_BLOCK_BYTES // (LANES * itemsize)          # 8192 f32 / 16384 bf16 / 32768 i8
    tm_target = max(CH_ROWS, (tm_target // CH_ROWS) * CH_ROWS)    # multiple of CH_ROWS (and 32)
    if tm_max is not None:
        tm_target = min(tm_target, max(8, (int(tm_max) // 8) * 8))
    if rows >= CH_ROWS and tm_target >= CH_ROWS:
        tm = min(tm_target, (rows // CH_ROWS) * CH_ROWS)          # multiple of CH_ROWS
    else:
        tm = min(tm_target, rows)                                 # small arrays: one block
    ch = CH_ROWS if (tm >= CH_ROWS and tm % CH_ROWS == 0) else tm
    return tm, ch


def _make_mse_kernel(rows, tm, ch, nb):
    """Build the kernel with all sizes / masking decisions baked in at trace time."""
    total = -(-rows // tm)          # real blocks covering `rows`
    n_full = rows // tm             # blocks fully inside the array
    n_slots = NCORES * nb           # grid block slots (may exceed `total` by 1)
    needs_mask = n_slots > n_full   # only then is any mask code emitted
    n_chunks = tm // ch

    def kernel(pred_ref, target_ref, out_ref):
        c = pl.program_id(0)        # core slot (parallel axis)
        i = pl.program_id(1)        # block step within this core (arbitrary axis)

        @pl.when(i == 0)
        def _init():
            out_ref[...] = jnp.zeros_like(out_ref)

        g = c * nb + i              # global (unclamped) block slot

        def accumulate(masked):
            def chunk_body(j, carry):
                off = pl.multiple_of(j * ch, ch)
                p = pred_ref[pl.ds(off, ch), :].astype(jnp.float32)
                t = target_ref[pl.ds(off, ch), :].astype(jnp.float32)
                d = p - t
                sq = d * d
                if masked:          # emitted only for tail block slots
                    row0 = g * tm + off
                    rid = jax.lax.broadcasted_iota(jnp.int32, (ch, LANES), 0) + row0
                    sq = jnp.where(rid < rows, sq, 0.0)
                # fold (ch,128) -> (8,128): pure vector adds into the resident output block
                out_ref[...] += jnp.sum(sq.reshape(ch // 8, 8, LANES), axis=0)
                return carry
            jax.lax.fori_loop(0, n_chunks, chunk_body, 0)

        if not needs_mask:
            accumulate(False)       # hot path: no iota/compare/select anywhere
        else:
            if n_full > 0:
                @pl.when(g < n_full)
                def _full_blocks():
                    accumulate(False)

            @pl.when(g >= n_full)
            def _tail_blocks():
                accumulate(True)    # partial block and/or clamped duplicate slot -> masked

    return kernel


def spec_mse_loss(pred_target, target, *, tm_max=None):
    """Equivalent to torch.nn.functional.mse_loss(pred_target, target) (mean reduction)."""
    assert pred_target.shape == target.shape, "shapes must match"
    n_elems = int(pred_target.size)
    assert n_elems > 0

    # Keep native dtype (cast to f32 happens inside the kernel, halving HBM traffic for bf16).
    p = pred_target.reshape(-1)
    t = target.reshape(-1)

    # Pad only to a multiple of 8*128 (< 1024 zeros) so the flat vector reshapes to a
    # lane-dense (rows, 128) slab.  Zero padding contributes 0 to the sum.
    slab = 8 * LANES
    padded = pl.cdiv(n_elems, slab) * slab
    if padded != n_elems:
        p = jnp.pad(p, (0, padded - n_elems))
        t = jnp.pad(t, (0, padded - n_elems))
    rows = padded // LANES
    p2 = p.reshape(rows, LANES)
    t2 = t.reshape(rows, LANES)

    itemsize = max(p2.dtype.itemsize, t2.dtype.itemsize)
    tm, ch = _pick_tiles(rows, itemsize, tm_max)

    total = pl.cdiv(rows, tm)       # real blocks
    nb = pl.cdiv(total, NCORES)     # block slots per core
    last_blk = total - 1

    # Clamp the block index so a (possibly) empty trailing slot never issues an OOB DMA;
    # its contribution is zeroed by the in-kernel mask (which uses the unclamped index).
    def row_block(c, i):
        return (jnp.minimum(c * nb + i, last_blk), 0)

    in_spec = pl.BlockSpec((tm, LANES), row_block)
    out_spec = pl.BlockSpec((None, 8, LANES), lambda c, i: (c, 0, 0))

    partial = pl.pallas_call(
        _make_mse_kernel(rows, tm, ch, nb),
        out_shape=jax.ShapeDtypeStruct((NCORES, 8, LANES), jnp.float32),
        grid=(NCORES, nb),
        in_specs=[in_spec, in_spec],
        out_specs=out_spec,
        compiler_params=pltpu.CompilerParams(
            dimension_semantics=("parallel", "arbitrary"),
            vmem_limit_bytes=VMEM_LIMIT_BYTES,
        ),
    )(p2, t2)

    # Tiny final reduction + static 1/N scale in plain JAX.
    return jnp.sum(partial) / n_elems


class SpecMSELoss:
    """Parity wrapper for the PyTorch module (criterion = mse_loss, mean reduction)."""

    def __init__(self, size_average=True):
        self.size_average = size_average  # kept for API parity; mse_loss default is 'mean'

    def __call__(self, pred_target, target):
        return spec_mse_loss(pred_target, target)


if __name__ == "__main__":
    key = jax.random.PRNGKey(0)
    ks = jax.random.split(key, 8)

    def ref_mse(a, b):
        return jnp.mean((a.astype(jnp.float32) - b.astype(jnp.float32)) ** 2)

    loss_mod = SpecMSELoss()

    # 1) Small NCHW-style spectrogram batch.
    pred = jax.random.normal(ks[0], (2, 4, 16, 16), dtype=jnp.float32)
    targ = jax.random.normal(ks[1], (2, 4, 16, 16), dtype=jnp.float32)
    l1 = jax.block_until_ready(loss_mod(pred, targ))
    assert jnp.allclose(l1, ref_mse(pred, targ), rtol=1e-5, atol=1e-6), (l1, ref_mse(pred, targ))

    # 2) Element count not a multiple of 8*128 -> wrapper pad path.
    a = jax.random.normal(ks[2], (3, 5, 7), dtype=jnp.float32)
    b = jax.random.normal(ks[3], (3, 5, 7), dtype=jnp.float32)
    l2 = jax.block_until_ready(spec_mse_loss(a, b))
    assert jnp.allclose(l2, ref_mse(a, b), rtol=1e-5, atol=1e-6), (l2, ref_mse(a, b))

    # 3) Multi-step inner grid + odd block count + clamped empty slot (small tm override).
    c_ = jax.random.normal(ks[4], (5, 8, 128), dtype=jnp.float32)
    d_ = jax.random.normal(ks[5], (5, 8, 128), dtype=jnp.float32)
    l3 = jax.block_until_ready(spec_mse_loss(c_, d_, tm_max=8))
    assert jnp.allclose(l3, ref_mse(c_, d_), rtol=1e-5, atol=1e-6), (l3, ref_mse(c_, d_))

    # 4) Multi-chunk inner compute loop (rows=1024, ch=512) + in-kernel bf16 -> f32 cast.
    e_ = jax.random.normal(ks[6], (8, 128, 128), dtype=jnp.bfloat16)
    f_ = jax.random.normal(ks[7], (8, 128, 128), dtype=jnp.bfloat16)
    l4 = jax.block_until_ready(spec_mse_loss(e_, f_))
    assert jnp.allclose(l4, ref_mse(e_, f_), rtol=1e-4, atol=1e-5), (l4, ref_mse(e_, f_))

    print("KERNEL_OK")
</pallas_src>

<mosaic_0001>
module attributes {stable_mosaic.version = 11 : i64} {
  func.func @kernel(%arg0: i32, %arg1: i32, %arg2: memref<16x128xf32, #tpu.memory_space<vmem>>, %arg3: memref<16x128xf32, #tpu.memory_space<vmem>>, %arg4: memref<1x8x128xf32, #tpu.memory_space<vmem>>) attributes {dimension_semantics = [#tpu.dimension_semantics<parallel>, #tpu.dimension_semantics<arbitrary>], iteration_bounds = array<i64: 2, 1>, scalar_prefetch = 0 : i64, scratch_operands = 0 : i64, tpu.core_type = #tpu.core_type<tc>, window_params = [{transform_indices = @transform_0, window_bounds = array<i64: 16, 128>}, {transform_indices = @transform_1, window_bounds = array<i64: 16, 128>}, {transform_indices = @transform_2, window_bounds = array<i64: 1, 8, 128>}]} {
    %c0_i32 = arith.constant 0 : i32
    %0 = arith.cmpi eq, %arg1, %c0_i32 : i32
    %1 = arith.extui %0 : i1 to i32
    %c0_i32_0 = arith.constant 0 : i32
    %2 = arith.cmpi ne, %1, %c0_i32_0 : i32
    scf.if %2 {
      %cst = arith.constant 0.000000e+00 : f32
      %11 = vector.broadcast %cst : f32 to vector<8x128xf32>
      %c0 = arith.constant 0 : index
      %c0_5 = arith.constant 0 : index
      %c0_6 = arith.constant 0 : index
      %12 = vector.load %arg4[%c0, %c0_5, %c0_6] : memref<1x8x128xf32, #tpu.memory_space<vmem>>, vector<1x8x128xf32>
      %13 = vector.shape_cast %12 : vector<1x8x128xf32> to vector<8x128xf32>
      %14 = vector.shape_cast %11 : vector<8x128xf32> to vector<1x8x128xf32>
      tpu.vector_store %arg4[%c0, %c0_5, %c0_6], %14 {strides = array<i32>} : memref<1x8x128xf32, #tpu.memory_space<vmem>>, vector<1x8x128xf32>,
    } else {
    }
    %c1_i32 = arith.constant 1 : i32
    %3 = arith.muli %arg0, %c1_i32 : i32
    %4 = arith.addi %3, %arg1 : i32
    %c1_i32_1 = arith.constant 1 : i32
    %5 = arith.cmpi slt, %4, %c1_i32_1 : i32
    %6 = arith.extui %5 : i1 to i32
    %c0_i32_2 = arith.constant 0 : i32
    %7 = arith.cmpi ne, %6, %c0_i32_2 : i32
    scf.if %7 {
      %c0_i32_5 = arith.constant 0 : i32
      %c16_i32 = arith.constant 16 : i32
      %11 = arith.muli %c0_i32_5, %c16_i32 : i32
      %12 = tpu.assume_multiple %11, 16 : i32
      %13 = arith.index_cast %12 : i32 to index
      %c0 = arith.constant 0 : index
      %14 = vector.load %arg2[%13, %c0] : memref<16x128xf32, #tpu.memory_space<vmem>>, vector<16x128xf32>
      %15 = arith.index_cast %12 : i32 to index
      %c0_6 = arith.constant 0 : index
      %16 = vector.load %arg3[%15, %c0_6] : memref<16x128xf32, #tpu.memory_space<vmem>>, vector<16x128xf32>
      %17 = arith.subf %14, %16 : vector<16x128xf32>
      %18 = arith.mulf %17, %17 : vector<16x128xf32>
      %c0_7 = arith.constant 0 : index
      %c0_8 = arith.constant 0 : index
      %c0_9 = arith.constant 0 : index
      %19 = vector.load %arg4[%c0_7, %c0_8, %c0_9] : memref<1x8x128xf32, #tpu.memory_space<vmem>>, vector<1x8x128xf32>
      %20 = vector.shape_cast %19 : vector<1x8x128xf32> to vector<8x128xf32>
      %21 = vector.shape_cast %18 : vector<16x128xf32> to vector<2x8x128xf32>
      %cst = arith.constant dense<0.000000e+00> : vector<8x128xf32>
      %22 = vector.multi_reduction <add>, %21, %cst [0] : vector<2x8x128xf32> to vector<8x128xf32>
      %23 = arith.addf %20, %22 : vector<8x128xf32>
      %c0_10 = arith.constant 0 : index
      %c0_11 = arith.constant 0 : index
      %c0_12 = arith.constant 0 : index
      %24 = vector.load %arg4[%c0_10, %c0_11, %c0_12] : memref<1x8x128xf32, #tpu.memory_space<vmem>>, vector<1x8x128xf32>
      %25 = vector.shape_cast %24 : vector<1x8x128xf32> to vector<8x128xf32>
      %26 = vector.shape_cast %23 : vector<8x128xf32> to vector<1x8x128xf32>
      tpu.vector_store %arg4[%c0_10, %c0_11, %c0_12], %26 {strides = array<i32>} : memref<1x8x128xf32, #tpu.memory_space<vmem>>, vector<1x8x128xf32>,
      %c1_i32_13 = arith.constant 1 : i32
    } else {
    }
    %c1_i32_3 = arith.constant 1 : i32
    %8 = arith.cmpi sge, %4, %c1_i32_3 : i32
    %9 = arith.extui %8 : i1 to i32
    %c0_i32_4 = arith.constant 0 : i32
    %10 = arith.cmpi ne, %9, %c0_i32_4 : i32
    scf.if %10 {
      %c0_i32_5 = arith.constant 0 : i32
      %c16_i32 = arith.constant 16 : i32
      %11 = arith.muli %c0_i32_5, %c16_i32 : i32
      %12 = tpu.assume_multiple %11, 16 : i32
      %13 = arith.index_cast %12 : i32 to index
      %c0 = arith.constant 0 : index
      %14 = vector.load %arg2[%13, %c0] : memref<16x128xf32, #tpu.memory_space<vmem>>, vector<16x128xf32>
      %15 = arith.index_cast %12 : i32 to index
      %c0_6 = arith.constant 0 : index
      %16 = vector.load %arg3[%15, %c0_6] : memref<16x128xf32, #tpu.memory_space<vmem>>, vector<16x128xf32>
      %17 = arith.subf %14, %16 : vector<16x128xf32>
      %18 = arith.mulf %17, %17 : vector<16x128xf32>
      %c16_i32_7 = arith.constant 16 : i32
      %19 = arith.muli %4, %c16_i32_7 : i32
      %20 = arith.addi %19, %12 : i32
      %21 = tpu.iota {dimensions = array<i32: 0>} : vector<16x128xi32>
      %22 = vector.broadcast %20 : i32 to vector<16x128xi32>
      %23 = arith.addi %21, %22 : vector<16x128xi32>
      %c16_i32_8 = arith.constant 16 : i32
      %24 = vector.broadcast %c16_i32_8 : i32 to vector<16x128xi32>
      %25 = arith.cmpi slt, %23, %24 : vector<16x128xi32>
      %cst = arith.constant 0.000000e+00 : f32
      %26 = vector.broadcast %cst : f32 to vector<16x128xf32>
      %27 = arith.select %25, %18, %26 : vector<16x128xi1>, vector<16x128xf32>
      %c0_9 = arith.constant 0 : index
      %c0_10 = arith.constant 0 : index
      %c0_11 = arith.constant 0 : index
      %28 = vector.load %arg4[%c0_9, %c0_10, %c0_11] : memref<1x8x128xf32, #tpu.memory_space<vmem>>, vector<1x8x128xf32>
      %29 = vector.shape_cast %28 : vector<1x8x128xf32> to vector<8x128xf32>
      %30 = vector.shape_cast %27 : vector<16x128xf32> to vector<2x8x128xf32>
      %cst_12 = arith.constant dense<0.000000e+00> : vector<8x128xf32>
      %31 = vector.multi_reduction <add>, %30, %cst_12 [0] : vector<2x8x128xf32> to vector<8x128xf32>
      %32 = arith.addf %29, %31 : vector<8x128xf32>
      %c0_13 = arith.constant 0 : index
      %c0_14 = arith.constant 0 : index
      %c0_15 = arith.constant 0 : index
      %33 = vector.load %arg4[%c0_13, %c0_14, %c0_15] : memref<1x8x128xf32, #tpu.memory_space<vmem>>, vector<1x8x128xf32>
      %34 = vector.shape_cast %33 : vector<1x8x128xf32> to vector<8x128xf32>
      %35 = vector.shape_cast %32 : vector<8x128xf32> to vector<1x8x128xf32>
      tpu.vector_store %arg4[%c0_13, %c0_14, %c0_15], %35 {strides = array<i32>} : memref<1x8x128xf32, #tpu.memory_space<vmem>>, vector<1x8x128xf32>,
      %c1_i32_16 = arith.constant 1 : i32
    } else {
    }
    return
  }
  func.func @transform_0(%arg0: i32, %arg1: i32) -> (i32, i32) {
    %c1_i32 = arith.constant 1 : i32
    %0 = arith.muli %arg0, %c1_i32 : i32
    %1 = arith.addi %0, %arg1 : i32
    %c0_i32 = arith.constant 0 : i32
    %2 = arith.minsi %1, %c0_i32 : i32
    %c0_i32_0 = arith.constant 0 : i32
    %c0_i32_1 = arith.constant 0 : i32
    return %2, %c0_i32_0 : i32, i32
  }
  func.func @transform_1(%arg0: i32, %arg1: i32) -> (i32, i32) {
    %c1_i32 = arith.constant 1 : i32
    %0 = arith.muli %arg0, %c1_i32 : i32
    %1 = arith.addi %0, %arg1 : i32
    %c0_i32 = arith.constant 0 : i32
    %2 = arith.minsi %1, %c0_i32 : i32
    %c0_i32_0 = arith.constant 0 : i32
    %c0_i32_1 = arith.constant 0 : i32
    return %2, %c0_i32_0 : i32, i32
  }
  func.func @transform_2(%arg0: i32, %arg1: i32) -> (i32, i32, i32) {
    %c0_i32 = arith.constant 0 : i32
    %c0_i32_0 = arith.constant 0 : i32
    %c0_i32_1 = arith.constant 0 : i32
    return %arg0, %c0_i32, %c0_i32_0 : i32, i32, i32
  }
}

</mosaic_0001>

<llo_original>
// kernel: tpu_custom_call.1
$region0: #{tpu_custom_call.1}
  #allocation0 [shape = 'u32[]', space=smem, size = 0x4, offset = 0x4, fixed_abs, tag = 'smem constant byte address 0x4 - core index']
  #allocation1 [shape = 'u32[144,128]{1,0:T(1,128)}', space=vmem, size = 0x12000, scoped, tag = 'internal scratch']
  %s0 = inlined_call_operand.hbm [shape: f32[16,128], index: 0, kind: input, shape index: {}]
  %s1 = inlined_call_operand.hbm [shape: f32[16,128], index: 1, kind: input, shape index: {}]
  %s2 = inlined_call_operand.hbm [shape: f32[2,8,128], index: 2, kind: output, shape index: {}]
  %s3 = sld [smem:[#allocation0]]
  $region61: #{tpu_custom_call.1} parent=0
    _
  %s5 = ssub.s32 1, %s3
  %s6 = scalar_select 0, %s5, %s3
  $region1: #{tpu_custom_call.1} parent=0
    #allocation2 [shape = 'u8[16384]{0}', space=vmem, size = 0x4000, scoped, tag = 'input window, operand 0']
    #allocation3 [shape = 's32[2]{0}', space=sflag, size = 0x8, scoped, tag = 'scoped memory for tpu_custom_call.1']
    #allocation4 [shape = 's32[2]{0}', space=sflag, size = 0x8, scoped, tag = 'scoped memory for tpu_custom_call.1']
    #allocation5 [shape = 'u8[16384]{0}', space=vmem, size = 0x4000, scoped, tag = 'input window, operand 1']
    #allocation6 [shape = 's32[2]{0}', space=sflag, size = 0x8, scoped, tag = 'scoped memory for tpu_custom_call.1']
    #allocation7 [shape = 'u8[8192]{0}', space=vmem, size = 0x2000, scoped, tag = 'output window, operand 0']
    %7 = vsyncpa [#allocation3], 0
    %s8 = scalar_lea.sflag [#allocation3], 1
    %9 = vsyncpa %s8, 0
    %10 = vsyncpa [#allocation6], 0
    %s11 = scalar_lea.sflag [#allocation6], 1
    %12 = vsyncpa %s11, 0
    %13 = vsyncpa [#allocation4], 0
    %s14 = scalar_lea.sflag [#allocation4], 1
    %15 = vsyncpa %s14, 0
    loop: start=0, step=1, limit=4
    $region2: #{tpu_custom_call.1} parent=1 // loop_pre_header
      _
    $region3: #{tpu_custom_call.1} parent=1 // loop_header
      %s17 = sphi 0, %s21
      %p18 = scmp.ge.s32.totalorder %s17, 4
      %s24 = sphi 0, %s36
      %s25 = sphi 0, %s32
      %s26 = sphi 0, %s24
      %s27 = sphi 0, %s25
      %s28 = sphi 0, %s26
      %s29 = sphi 0, %s27
      %s45 = sphi 0, %s47
      %s48 = sphi 0, %s45
      %s49 = sphi 0, %s48
      %s65 = sphi 0, %s49
      %s77 = sphi 0, %s79
      %s80 = sphi 0, %s77
      %s81 = sphi 0, %s80
      %s97 = sphi 0, %s81
      %s103 = sphi 0, %s105
      %s106 = sphi 0, %s103
      %s107 = sphi 0, %s106
      %s123 = sphi 0, %s107
    $region4: #{tpu_custom_call.1} parent=1 // loop_header_branch
      %20 = sbr.rel (%p18) target = $region8
    $region5: #{tpu_custom_call.1} parent=1 // loop_body
      %s22 = ssub.s32 %s17, 1
      %s23 = ssub.s32 %s17, 2
      %s30 = sadd.s32 1, %s25
      %p31 = scmp.ge.s32.totalorder %s30, 1
      %s32 = scalar_select %p31, 0, %s30
      %s33 = sadd.s32 1, %s24
      %s34 = scalar_select %p31, %s33, %s24
      %p35 = scmp.ge.s32.totalorder %s34, 2
      %s36 = scalar_select %p35, 0, %s34
      %s37 = sadd.s32 %s24, %s25
      %p38 = scmp.lt.s32.totalorder %s37, 0
      %s39 = scalar_select %p38, %s37, 0
      %s40 = sadd.s32 %s36, %s32
      %p41 = scmp.lt.s32.totalorder %s40, 0
      %s42 = scalar_select %p41, %s40, 0
      %s43 = ssub.s32 %s39, %s42
      %p44 = scmp.eq.s32.totalorder %s43, 0
      %s46 = sadd.s32 %s45, 1
      %s47 = scalar_select %p44, %s45, %s46
      %p50 = pneg %p44
      %p51 = scmp.eq.s32.totalorder %s17, 1
      %p52 = por %p50, %p51
      %p53 = scmp.ne.s32.totalorder %s45, %s48
      %p54 = scmp.eq.s32.totalorder %s17, 0
      %p55 = por %p53, %p54
      %p56 = scmp.ne.s32.totalorder %s45, %s48
      %p57 = scmp.eq.s32.totalorder %s22, 1
      %p58 = por %p56, %p57
      %p59 = scmp.ne.s32.totalorder %s48, %s49
      %p60 = scmp.eq.s32.totalorder %s22, 0
      %p61 = por %p59, %p60
      %p62 = scmp.ne.s32.totalorder %s48, %s49
      %p63 = scmp.eq.s32.totalorder %s23, 1
      %p64 = por %p62, %p63
      %p66 = scmp.ne.s32.totalorder %s49, %s65
      %p67 = scmp.eq.s32.totalorder %s23, 0
      %p68 = por %p66, %p67
      %s69 = sadd.s32 %s24, %s25
      %p70 = scmp.lt.s32.totalorder %s69, 0
      %s71 = scalar_select %p70, %s69, 0
      %s72 = sadd.s32 %s36, %s32
      %p73 = scmp.lt.s32.totalorder %s72, 0
      %s74 = scalar_select %p73, %s72, 0
      %s75 = ssub.s32 %s71, %s74
      %p76 = scmp.eq.s32.totalorder %s75, 0
      %s78 = sadd.s32 %s77, 1
      %s79 = scalar_select %p76, %s77, %s78
      %p82 = pneg %p76
      %p83 = scmp.eq.s32.totalorder %s17, 1
      %p84 = por %p82, %p83
      %p85 = scmp.ne.s32.totalorder %s77, %s80
      %p86 = scmp.eq.s32.totalorder %s17, 0
      %p87 = por %p85, %p86
      %p88 = scmp.ne.s32.totalorder %s77, %s80
      %p89 = scmp.eq.s32.totalorder %s22, 1
      %p90 = por %p88, %p89
      %p91 = scmp.ne.s32.totalorder %s80, %s81
      %p92 = scmp.eq.s32.totalorder %s22, 0
      %p93 = por %p91, %p92
      %p94 = scmp.ne.s32.totalorder %s80, %s81
      %p95 = scmp.eq.s32.totalorder %s23, 1
      %p96 = por %p94, %p95
      %p98 = scmp.ne.s32.totalorder %s81, %s97
      %p99 = scmp.eq.s32.totalorder %s23, 0
      %p100 = por %p98, %p99
      %s101 = ssub.s32 %s24, %s36
      %p102 = scmp.eq.s32.totalorder %s101, 0
      %s104 = sadd.s32 %s103, 1
      %s105 = scalar_select %p102, %s103, %s104
      %p108 = pneg %p102
      %p109 = scmp.eq.s32.totalorder %s17, 1
      %p110 = por %p108, %p109
      %p111 = scmp.ne.s32.totalorder %s103, %s106
      %p112 = scmp.eq.s32.totalorder %s17, 0
      %p113 = por %p111, %p112
      %p114 = scmp.ne.s32.totalorder %s103, %s106
      %p115 = scmp.eq.s32.totalorder %s22, 1
      %p116 = por %p114, %p115
      %p117 = scmp.ne.s32.totalorder %s106, %s107
      %p118 = scmp.eq.s32.totalorder %s22, 0
      %p119 = por %p117, %p118
      %p120 = scmp.ne.s32.totalorder %s106, %s107
      %p121 = scmp.eq.s32.totalorder %s23, 1
      %p122 = por %p120, %p121
      %p124 = scmp.ne.s32.totalorder %s107, %s123
      %p125 = scmp.eq.s32.totalorder %s23, 0
      %p126 = por %p124, %p125
      %p127 = scmp.le.s32.totalorder 1, %s17
      %p128 = scmp.lt.s32.totalorder %s17, 3
      %p129 = pnand %p127, %p128
      %p130 = pneg %p129
      // Predicated region
      $region9: #{tpu_custom_call.1} parent=5 // pred_check
        _
      $region10: #{tpu_custom_call.1} parent=5 // pred_check_branch
        %132 = sbr.rel (%p129) target = $region12
      $region11: #{tpu_custom_call.1} parent=5 // pred_region
        %s133 = ssub.s32 %s17, 1
      $region12: #{tpu_custom_call.1} parent=5 // pred_fallthru
        _
      %p134 = scmp.lt.s32.totalorder %s17, 2
      // Predicated region
      $region13: #{tpu_custom_call.1} parent=5 // pred_check
        %p135 = pneg %p134
      $region14: #{tpu_custom_call.1} parent=5 // pred_check_branch
        %137 = sbr.rel (%p135) target = $region16
      $region15: #{tpu_custom_call.1} parent=5 // pred_region
        // Predicated region
        $region17: #{tpu_custom_call.1} parent=15 // pred_check
          %p138 = pneg %p55
        $region18: #{tpu_custom_call.1} parent=15 // pred_check_branch
          %140 = sbr.rel (%p138) target = $region20
        $region19: #{tpu_custom_call.1} parent=15 // pred_region
          %s141 = sand.u32 %s45, 1
          %s142 = scalar_lea.sflag [#allocation3], %s141
          %s143 = sand.u32 %s45, 1
          %s144 = smul.addr %s143, 16
          %s145 = scalar_lea.vmem [#allocation2], %s144
          %s146 = sadd.s32 %s24, %s25
          %p147 = scmp.lt.s32.totalorder %s146, 0
          %s148 = scalar_select %p147, %s146, 0
          %s149 = smul.u32 2, %s148
          %s151 = ssub.s32 256, 256
          %152 = vsyncadd %s142, %s151
          %s153 = smul.addr %s149, 128
          %s154 = scalar_lea.hbm %s0, %s153
          %s155 = sshll.u32 %s145, 4
          %s156 = int_to_ptr.vmem [resolvable:$true] %s155
          %161 = dma.hbm_to_vmem [thread:$0]  %s154, 256, %s156, %s142, 128, 128, 8
        $region20: #{tpu_custom_call.1} parent=15 // pred_fallthru
          _
        // Predicated region
        $region21: #{tpu_custom_call.1} parent=15 // pred_check
          %p162 = pneg %p87
        $region22: #{tpu_custom_call.1} parent=15 // pred_check_branch
          %164 = sbr.rel (%p162) target = $region24
        $region23: #{tpu_custom_call.1} parent=15 // pred_region
          %s165 = sand.u32 %s77, 1
          %s166 = scalar_lea.sflag [#allocation6], %s165
          %s167 = sand.u32 %s77, 1
          %s168 = smul.addr %s167, 16
          %s169 = scalar_lea.vmem [#allocation5], %s168
          %s170 = sadd.s32 %s24, %s25
          %p171 = scmp.lt.s32.totalorder %s170, 0
          %s172 = scalar_select %p171, %s170, 0
          %s173 = smul.u32 2, %s172
          %s175 = ssub.s32 256, 256
          %176 = vsyncadd %s166, %s175
          %s177 = smul.addr %s173, 128
          %s178 = scalar_lea.hbm %s1, %s177
          %s179 = sshll.u32 %s169, 4
          %s180 = int_to_ptr.vmem [resolvable:$true] %s179
          %185 = dma.hbm_to_vmem [thread:$0]  %s178, 256, %s180, %s166, 128, 128, 8
        $region24: #{tpu_custom_call.1} parent=15 // pred_fallthru
          _
      $region16: #{tpu_custom_call.1} parent=5 // pred_fallthru
        _
      %p186 = scmp.le.s32.totalorder 1, %s17
      %p187 = scmp.lt.s32.totalorder %s17, 3
      %p188 = pnand %p186, %p187
      %p189 = pneg %p188
      // Predicated region
      $region25: #{tpu_custom_call.1} parent=5 // pred_check
        _
      $region26: #{tpu_custom_call.1} parent=5 // pred_check_branch
        %191 = sbr.rel (%p188) target = $region28
      $region27: #{tpu_custom_call.1} parent=5 // pred_region
        %s192 = ssub.s32 %s17, 1
        %s193 = sand.u32 %s48, 1
        %s194 = scalar_lea.sflag [#allocation3], %s193
        %s195 = sand.u32 %s48, 1
        %s196 = smul.addr %s195, 16
        %s197 = scalar_lea.vmem [#allocation2], %s196
        // Predicated region
        $region29: #{tpu_custom_call.1} parent=27 // pred_check
          %p198 = pneg %p61
        $region30: #{tpu_custom_call.1} parent=27 // pred_check_branch
          %200 = sbr.rel (%p198) target = $region32
        $region31: #{tpu_custom_call.1} parent=27 // pred_region
          %201 = dma.done %s194, 256
        $region32: #{tpu_custom_call.1} parent=27 // pred_fallthru
          _
        %s202 = sand.u32 %s80, 1
        %s203 = scalar_lea.sflag [#allocation6], %s202
        %s204 = sand.u32 %s80, 1
        %s205 = smul.addr %s204, 16
        %s206 = scalar_lea.vmem [#allocation5], %s205
        // Predicated region
        $region33: #{tpu_custom_call.1} parent=27 // pred_check
          %p207 = pneg %p93
        $region34: #{tpu_custom_call.1} parent=27 // pred_check_branch
          %209 = sbr.rel (%p207) target = $region36
        $region35: #{tpu_custom_call.1} parent=27 // pred_region
          %210 = dma.done %s203, 256
        $region36: #{tpu_custom_call.1} parent=27 // pred_fallthru
          _
        %s211 = sand.u32 %s48, 1
        %s212 = scalar_lea.sflag [#allocation3], %s211
        %s213 = sand.u32 %s48, 1
        %s214 = smul.addr %s213, 16
        %s215 = scalar_lea.vmem [#allocation2], %s214
        %p216 = pneg %p61
        %p217 = pneg %p58
        %s218 = sand.u32 %s80, 1
        %s219 = scalar_lea.sflag [#allocation6], %s218
        %s220 = sand.u32 %s80, 1
        %s221 = smul.addr %s220, 16
        %s222 = scalar_lea.vmem [#allocation5], %s221
        %p223 = pneg %p93
        %p224 = pneg %p90
        %p225 = pneg %p119
        %p226 = pneg %p116
        %s227 = sand.u32 %s106, 1
        %s228 = scalar_lea.sflag [#allocation4], %s227
        %s229 = sand.u32 %s106, 1
        %s230 = smul.addr %s229, 8
        %s231 = scalar_lea.vmem [#allocation7], %s230
        %s232 = sadd.s32 %s26, %s27
        %p233 = scmp.lt.s32.totalorder %s232, 0
        %s234 = scalar_select %p233, %s232, 0
        %s235 = smul.u32 2, %s234
        %s236 = sadd.s32 %s26, %s27
        %p237 = scmp.lt.s32.totalorder %s236, 0
        %s238 = scalar_select %p237, %s236, 0
        %s239 = smul.u32 2, %s238
        %p240 = scmp.eq.s32.totalorder %s27, 0
        // Predicated region
        $region37: #{tpu_custom_call.1} parent=27 // pred_check
          %p241 = pneg %p240
        $region38: #{tpu_custom_call.1} parent=27 // pred_check_branch
          %243 = sbr.rel (%p241) target = $region40
        $region39: #{tpu_custom_call.1} parent=27 // pred_region
          %244 = vst [vmem:[%s231] sm:$0xff] 0.0
        $region40: #{tpu_custom_call.1} parent=27 // pred_fallthru
          _
        %s245 = sadd.s32 %s26, %s27
        %p246 = scmp.lt.s32.totalorder %s245, 1
        // Predicated region
        $region41: #{tpu_custom_call.1} parent=27 // pred_check
          %p247 = pneg %p246
        $region42: #{tpu_custom_call.1} parent=27 // pred_check_branch
          %249 = sbr.rel (%p247) target = $region44
        $region43: #{tpu_custom_call.1} parent=27 // pred_region
          %v250 = vld [vmem:[%s197] sm:$0xff]
          %v251 = vld [vmem:[%s197 + $0x8] sm:$0xff]
          %v252 = vld [vmem:[%s206] sm:$0xff]
          %v253 = vld [vmem:[%s206 + $0x8] sm:$0xff]
          %v254 = vsub.f32 %v250, %v252
          %v255 = vsub.f32 %v251, %v253
          %v256 = vmul.f32 %v254, %v254
          %v257 = vmul.f32 %v255, %v255
          %v258 = vld [vmem:[%s231] sm:$0xff]
          %v259 = vadd.f32 %v256, %v257
          %v260 = vadd.f32 %v258, %v259
          %261 = vst [vmem:[%s231] sm:$0xff] %v260
        $region44: #{tpu_custom_call.1} parent=27 // pred_fallthru
          _
        %p262 = scmp.ge.s32.totalorder %s245, 1
        // Predicated region
        $region45: #{tpu_custom_call.1} parent=27 // pred_check
          %p263 = pneg %p262
        $region46: #{tpu_custom_call.1} parent=27 // pred_check_branch
          %265 = sbr.rel (%p263) target = $region48
        $region47: #{tpu_custom_call.1} parent=27 // pred_region
          %v266 = vld [vmem:[%s197] sm:$0xff]
          %v267 = vld [vmem:[%s197 + $0x8] sm:$0xff]
          %v268 = vld [vmem:[%s206] sm:$0xff]
          %v269 = vld [vmem:[%s206 + $0x8] sm:$0xff]
          %v270 = vsub.f32 %v266, %v268
          %v271 = vsub.f32 %v267, %v269
          %v272 = vmul.f32 %v270, %v270
          %v273 = vmul.f32 %v271, %v271
          %s274 = smul.u32 %s245, 16
          %s275 = sadd.s32 %s274, 0
          %v276 = vlaneseq
          %v277 = vshrl.u32 %v276, 7
          %v278 = vadd.s32 %v277, 8
          %v279 = vstv %s275
          %v280 = vadd.s32 %v277, %v279
          %v281 = vadd.s32 %v278, %v279
          %vm282 = vcmp.lt.s32.totalorder %v280, 16
          %vm283 = vcmp.lt.s32.totalorder %v281, 16
          %v284 = vsel %vm282, %v272, 0.0
          %v285 = vsel %vm283, %v273, 0.0
          %v286 = vld [vmem:[%s231] sm:$0xff]
          %v287 = vadd.f32 %v284, %v285
          %v288 = vadd.f32 %v286, %v287
          %289 = vst [vmem:[%s231] sm:$0xff] %v288
        $region48: #{tpu_custom_call.1} parent=27 // pred_fallthru
          _
        %s290 = sand.u32 %s106, 1
        %s291 = scalar_lea.sflag [#allocation4], %s290
        %s292 = sand.u32 %s106, 1
        %s293 = smul.addr %s292, 8
        %s294 = scalar_lea.vmem [#allocation7], %s293
        // Predicated region
        $region49: #{tpu_custom_call.1} parent=27 // pred_check
          %p295 = pneg %p116
        $region50: #{tpu_custom_call.1} parent=27 // pred_check_branch
          %297 = sbr.rel (%p295) target = $region52
        $region51: #{tpu_custom_call.1} parent=27 // pred_region
          %s299 = ssub.s32 128, 128
          %300 = vsyncadd %s291, %s299
          %s301 = smul.addr %s26, 128
          %s302 = scalar_lea.hbm %s2, %s301
          %s304 = sshll.u32 %s294, 4
          %s305 = int_to_ptr.vmem [resolvable:$true] %s304
          %307 = dma.vmem_to_hbm [thread:$0]  %s305, 128, %s302, %s291
        $region52: #{tpu_custom_call.1} parent=27 // pred_fallthru
          _
      $region28: #{tpu_custom_call.1} parent=5 // pred_fallthru
        _
      %p308 = scmp.le.s32.totalorder 2, %s17
      // Predicated region
      $region53: #{tpu_custom_call.1} parent=5 // pred_check
        %p309 = pneg %p308
      $region54: #{tpu_custom_call.1} parent=5 // pred_check_branch
        %311 = sbr.rel (%p309) target = $region56
      $region55: #{tpu_custom_call.1} parent=5 // pred_region
        %s312 = ssub.s32 %s17, 2
        // Predicated region
        $region57: #{tpu_custom_call.1} parent=55 // pred_check
          %p313 = pneg %p122
        $region58: #{tpu_custom_call.1} parent=55 // pred_check_branch
          %315 = sbr.rel (%p313) target = $region60
        $region59: #{tpu_custom_call.1} parent=55 // pred_region
          %s316 = sand.u32 %s107, 1
          %s317 = scalar_lea.sflag [#allocation4], %s316
          %s318 = sand.u32 %s107, 1
          %s319 = smul.addr %s318, 8
          %s320 = scalar_lea.vmem [#allocation7], %s319
          %321 = dma.done %s317, 128
        $region60: #{tpu_custom_call.1} parent=55 // pred_fallthru
          _
      $region56: #{tpu_custom_call.1} parent=5 // pred_fallthru
        _
    $region6: #{tpu_custom_call.1} parent=1 // loop_footer
      %s21 = sadd.s32 1, %s17
    $region7: #{tpu_custom_call.1} parent=1 // loop_footer_branch
      %16 = sbr.rel target = $region3
    $region8: #{tpu_custom_call.1} parent=1 // loop_exit
      _
    %322 = vsyncpa [#allocation3], 1
    %s323 = scalar_lea.sflag [#allocation3], 1
    %324 = vsyncpa %s323, 1
    %325 = vsyncpa [#allocation6], 1
    %s326 = scalar_lea.sflag [#allocation6], 1
    %327 = vsyncpa %s326, 1
    %328 = vsyncpa [#allocation4], 1
    %s329 = scalar_lea.sflag [#allocation4], 1
    %330 = vsyncpa %s329, 1

</llo_original>
